<compile_context>
chip_gen: v6e
topology: v6e:2x2x1
jax: 0.10.0
libtpu: 0.0.40
codegen_flags: <defaults>
</compile_context>

<pallas_src>
import jax
import jax.numpy as jnp
import numpy as np
from jax.experimental import pallas as pl
from jax.experimental.pallas import tpu as pltpu

# ---------------- problem sizes (small, consistent with the module) ----------
NUM_GRAPHS = 2
N_PER_GRAPH = 16
N = NUM_GRAPHS * N_PER_GRAPH          # total nodes (32)
NUM_FEATURES = 11                     # QM9 node features
F_IN = NUM_FEATURES + 3               # cat([x, pos], dim=1)
F_PAD = 128                           # pad input features to lane width
HIDDEN = 128                          # hidden_dim
E_PER_GRAPH = 40
GIN_EPS = 0.0                         # GINConv default eps
BN_EPS = 1e-5
G_PAD = 8                             # graph rows padded to a full sublane tile

# Graph-operator slab [N + G_PAD, N] bf16:
#   rows 0..N-1         : A_hat = A + (1+eps)*I
#   rows N..N+G-1       : mean-pool operator P
#   rows N+G..N+G_PAD-1 : zeros (padding)
#
# Weight slab [8,128,128] bf16:
#   0: conv1 lin1 (rows padded)   1: conv1 lin2 (BN1 folded)
#   2: conv2 lin1                 3: conv2 lin2 (BN2 folded)
#   4: conv3 lin1                 5: conv3 lin2 (BN3 folded)
#   6: fc1                        7: fc2 (padded to 128 output lanes)
# Bias slab [8,1,128] f32 uses the same indexing.


# ---------------- the Pallas kernel ------------------------------------------
def gin_kernel(gops_ref, x_ref, w_ref, b_ref, o_ref):
    f32 = jnp.float32
    bf16 = jnp.bfloat16

    a = gops_ref[0:N, :]              # [N, N]      bf16  (A + (1+eps)I)
    p = gops_ref[N:N + G_PAD, :]      # [G_PAD, N]  bf16  (mean-pool, zero-padded)

    def gin_block(h, k):
        # GIN aggregation (self term folded into A_hat), MXU, f32 accumulation.
        agg = jnp.dot(a, h.astype(bf16), preferred_element_type=f32)
        # MLP: Linear -> ReLU -> Linear (BatchNorm folded into 2nd Linear).
        z = jnp.dot(agg.astype(bf16), w_ref[k], preferred_element_type=f32)
        z = jnp.maximum(z + b_ref[k], 0.0)
        z = jnp.dot(z.astype(bf16), w_ref[k + 1], preferred_element_type=f32)
        return jnp.maximum(z + b_ref[k + 1], 0.0)   # outer ReLU (post-BN)

    h = x_ref[...]                                   # [N, 128] bf16 (padded feats)
    h = gin_block(h, 0)
    h = gin_block(h, 2)
    h = gin_block(h, 4)

    # global mean pool: [G_PAD, N] @ [N, H]
    g = jnp.dot(p, h.astype(bf16), preferred_element_type=f32)
    # fc1 + ReLU
    g = jnp.dot(g.astype(bf16), w_ref[6], preferred_element_type=f32)
    g = jnp.maximum(g + b_ref[6], 0.0)
    # fc2 (lane-padded to 128 outputs) -> full-sublane, lane-dense store
    o_ref[...] = (jnp.dot(g.astype(bf16), w_ref[7], preferred_element_type=f32)
                  + b_ref[7])


def gin_forward(gops, x_pad, w_slab, b_slab):
    flops = (3 * 2 * N * N * HIDDEN                      # 3 aggregation matmuls
             + 6 * 2 * N * HIDDEN * HIDDEN               # 6 MLP matmuls
             + 2 * G_PAD * N * HIDDEN                    # mean pool
             + 2 * 2 * G_PAD * HIDDEN * HIDDEN)          # fc1 + fc2
    bytes_accessed = (gops.size * 2 + x_pad.size * 2 + w_slab.size * 2
                      + b_slab.size * 4 + G_PAD * HIDDEN * 4)
    vmem = lambda: pl.BlockSpec(memory_space=pltpu.MemorySpace.VMEM)
    out = pl.pallas_call(
        gin_kernel,
        out_shape=jax.ShapeDtypeStruct((G_PAD, HIDDEN), jnp.float32),
        in_specs=[vmem() for _ in range(4)],
        out_specs=vmem(),
        cost_estimate=pl.CostEstimate(flops=int(flops), transcendentals=0,
                                      bytes_accessed=int(bytes_accessed)),
    )(gops, x_pad, w_slab, b_slab)
    return out[:NUM_GRAPHS, :1]                          # real (graphs, 1) result


# ---------------- pure-JAX reference (bit-matched bf16 math) -----------------
def gin_reference(gops, x_pad, w_slab, b_slab):
    f32, bf16 = jnp.float32, jnp.bfloat16
    a = gops[:N, :]
    p = gops[N:N + G_PAD, :]

    def block(h, k):
        agg = jnp.dot(a, h.astype(bf16), preferred_element_type=f32)
        z = jnp.dot(agg.astype(bf16), w_slab[k], preferred_element_type=f32)
        z = jnp.maximum(z + b_slab[k], 0.0)
        z = jnp.dot(z.astype(bf16), w_slab[k + 1], preferred_element_type=f32)
        return jnp.maximum(z + b_slab[k + 1], 0.0)

    h = x_pad
    for k in (0, 2, 4):
        h = block(h, k)
    g = jnp.dot(p, h.astype(bf16), preferred_element_type=f32)
    g = jnp.dot(g.astype(bf16), w_slab[6], preferred_element_type=f32)
    g = jnp.maximum(g + b_slab[6], 0.0)
    out = jnp.dot(g.astype(bf16), w_slab[7], preferred_element_type=f32) + b_slab[7]
    return out[:NUM_GRAPHS, :1]


# ---------------- deterministic parameter / input construction ---------------
def linear_params(key, fan_in, fan_out):
    # PyTorch default Linear init: U(-1/sqrt(fan_in), 1/sqrt(fan_in))
    kw, kb = jax.random.split(key)
    bound = 1.0 / np.sqrt(fan_in)
    w = jax.random.uniform(kw, (fan_in, fan_out), jnp.float32, -bound, bound)
    b = jax.random.uniform(kb, (fan_out,), jnp.float32, -bound, bound)
    return w, b


def bn_scale_shift():
    # PyTorch BatchNorm1d defaults: weight=1, bias=0, running_mean=0, running_var=1
    gamma = jnp.ones((HIDDEN,), jnp.float32)
    beta = jnp.zeros((HIDDEN,), jnp.float32)
    rmean = jnp.zeros((HIDDEN,), jnp.float32)
    rvar = jnp.ones((HIDDEN,), jnp.float32)
    scale = gamma / jnp.sqrt(rvar + BN_EPS)
    shift = beta - rmean * scale
    return scale, shift


def fold_bn(w, b, scale, shift):
    # y = (x @ w + b) * scale + shift  ==  x @ (w * scale) + (b * scale + shift)
    return w * scale[None, :], b * scale + shift


if __name__ == "__main__":
    key = jax.random.PRNGKey(0)
    keys = jax.random.split(key, 16)

    # --- synthetic graph data (QM9-like): x [N,11], pos [N,3], edges, batch ---
    x_feat = jax.random.normal(keys[0], (N, NUM_FEATURES), jnp.float32)
    pos = jax.random.normal(keys[1], (N, 3), jnp.float32)
    x = jnp.concatenate([x_feat, pos], axis=1)                  # [N, 14]
    x_pad = jnp.zeros((N, F_PAD), jnp.float32).at[:, :F_IN].set(x)

    # random directed edges, each graph self-contained
    srcs, dsts = [], []
    for g in range(NUM_GRAPHS):
        ks, kd = jax.random.split(keys[2 + g])
        srcs.append(jax.random.randint(ks, (E_PER_GRAPH,), 0, N_PER_GRAPH) + g * N_PER_GRAPH)
        dsts.append(jax.random.randint(kd, (E_PER_GRAPH,), 0, N_PER_GRAPH) + g * N_PER_GRAPH)
    src = jnp.concatenate(srcs)
    dst = jnp.concatenate(dsts)

    # dense aggregation operator: A_hat[i, j] = #edges j->i, plus (1+eps)*I
    A = jnp.zeros((N, N), jnp.float32).at[dst, src].add(1.0)
    a_hat = A + (1.0 + GIN_EPS) * jnp.eye(N, dtype=jnp.float32)

    # mean-pool operator P [G, N]
    batch = jnp.repeat(jnp.arange(NUM_GRAPHS), N_PER_GRAPH)     # [N]
    onehot = (batch[None, :] == jnp.arange(NUM_GRAPHS)[:, None]).astype(jnp.float32)
    pool = onehot / jnp.sum(onehot, axis=1, keepdims=True)      # [G, N]

    # pack A_hat + P into one graph-operator slab [N + G_PAD, N]
    gops = (jnp.zeros((N + G_PAD, N), jnp.float32)
            .at[:N, :].set(a_hat)
            .at[N:N + NUM_GRAPHS, :].set(pool))

    # --- parameters (BN folded into second Linear of each GIN MLP) -----------
    w1a_raw, b1a = linear_params(keys[4], F_IN, HIDDEN)
    w1a = jnp.zeros((F_PAD, HIDDEN), jnp.float32).at[:F_IN, :].set(w1a_raw)
    w1b, b1b = linear_params(keys[5], HIDDEN, HIDDEN)
    w1b, b1b = fold_bn(w1b, b1b, *bn_scale_shift())

    w2a, b2a = linear_params(keys[6], HIDDEN, HIDDEN)
    w2b, b2b = linear_params(keys[7], HIDDEN, HIDDEN)
    w2b, b2b = fold_bn(w2b, b2b, *bn_scale_shift())

    w3a, b3a = linear_params(keys[8], HIDDEN, HIDDEN)
    w3b, b3b = linear_params(keys[9], HIDDEN, HIDDEN)
    w3b, b3b = fold_bn(w3b, b3b, *bn_scale_shift())

    wf1, bf1 = linear_params(keys[10], HIDDEN, HIDDEN)
    wf2_raw, bf2_raw = linear_params(keys[11], HIDDEN, 1)
    wf2 = jnp.zeros((HIDDEN, HIDDEN), jnp.float32).at[:, :1].set(wf2_raw)
    bf2 = jnp.zeros((HIDDEN,), jnp.float32).at[:1].set(bf2_raw)

    # --- stack into slabs: weights bf16 [8,128,128], biases f32 [8,1,128] ----
    w_slab = jnp.stack([w1a, w1b, w2a, w2b, w3a, w3b, wf1, wf2]).astype(jnp.bfloat16)
    b_slab = jnp.stack([b1a, b1b, b2a, b2b, b3a, b3b, bf1, bf2])[:, None, :]

    # bf16 matmul inputs (f32 accumulation happens in the kernel)
    gops_bf = gops.astype(jnp.bfloat16)
    x_bf = x_pad.astype(jnp.bfloat16)

    out = gin_forward(gops_bf, x_bf, w_slab, b_slab)
    out = jax.block_until_ready(out)

    ref = gin_reference(gops_bf, x_bf, w_slab, b_slab)

    np.testing.assert_allclose(np.asarray(out), np.asarray(ref), rtol=1e-3, atol=1e-3)
    assert out.shape == (NUM_GRAPHS, 1)
    print("KERNEL_OK")
</pallas_src>

<mosaic_0001>
module attributes {stable_mosaic.version = 11 : i64} {
  func.func @gin_kernel(%arg0: memref<40x32xbf16, #tpu.memory_space<vmem>>, %arg1: memref<32x128xbf16, #tpu.memory_space<vmem>>, %arg2: memref<8x128x128xbf16, #tpu.memory_space<vmem>>, %arg3: memref<8x1x128xf32, #tpu.memory_space<vmem>>, %arg4: memref<8x128xf32, #tpu.memory_space<vmem>>) attributes {dimension_semantics = [], scalar_prefetch = 0 : i64, scratch_operands = 0 : i64, tpu.core_type = #tpu.core_type<tc>} {
    %c0 = arith.constant 0 : index
    %c0_0 = arith.constant 0 : index
    %0 = vector.load %arg0[%c0, %c0_0] : memref<40x32xbf16, #tpu.memory_space<vmem>>, vector<32x32xbf16>
    %c32 = arith.constant 32 : index
    %c0_1 = arith.constant 0 : index
    %1 = vector.load %arg0[%c32, %c0_1] : memref<40x32xbf16, #tpu.memory_space<vmem>>, vector<8x32xbf16>
    %c0_2 = arith.constant 0 : index
    %c0_3 = arith.constant 0 : index
    %2 = vector.load %arg1[%c0_2, %c0_3] : memref<32x128xbf16, #tpu.memory_space<vmem>>, vector<32x128xbf16>
    %cst = arith.constant dense<0.000000e+00> : vector<32x128xf32>
    %3 = tpu.matmul %0, %2, %cst {dimension_numbers = #tpu.dot_dimension_numbers<[1], [0], [0], [1], [0, 0, 1, 1], [], []>} : vector<32x32xbf16>, vector<32x128xbf16>, vector<32x128xf32> -> vector<32x128xf32>
    %4 = arith.truncf %3 : vector<32x128xf32> to vector<32x128xbf16>
    %c0_4 = arith.constant 0 : index
    %c0_5 = arith.constant 0 : index
    %c0_6 = arith.constant 0 : index
    %5 = vector.load %arg2[%c0_4, %c0_5, %c0_6] : memref<8x128x128xbf16, #tpu.memory_space<vmem>>, vector<1x128x128xbf16>
    %6 = vector.shape_cast %5 : vector<1x128x128xbf16> to vector<128x128xbf16>
    %cst_7 = arith.constant dense<0.000000e+00> : vector<32x128xf32>
    %7 = tpu.matmul %4, %6, %cst_7 {dimension_numbers = #tpu.dot_dimension_numbers<[1], [0], [0], [1], [0, 0, 1, 1], [], []>} : vector<32x128xbf16>, vector<128x128xbf16>, vector<32x128xf32> -> vector<32x128xf32>
    %c0_8 = arith.constant 0 : index
    %c0_9 = arith.constant 0 : index
    %c0_10 = arith.constant 0 : index
    %8 = vector.load %arg3[%c0_8, %c0_9, %c0_10] : memref<8x1x128xf32, #tpu.memory_space<vmem>>, vector<1x1x128xf32>
    %9 = vector.shape_cast %8 : vector<1x1x128xf32> to vector<1x128xf32>
    %10 = vector.broadcast %9 : vector<1x128xf32> to vector<32x128xf32>
    %11 = arith.addf %7, %10 : vector<32x128xf32>
    %cst_11 = arith.constant 0.000000e+00 : f32
    %12 = vector.broadcast %cst_11 : f32 to vector<32x128xf32>
    %13 = arith.maximumf %11, %12 : vector<32x128xf32>
    %14 = arith.truncf %13 : vector<32x128xf32> to vector<32x128xbf16>
    %c1 = arith.constant 1 : index
    %c0_12 = arith.constant 0 : index
    %c0_13 = arith.constant 0 : index
    %15 = vector.load %arg2[%c1, %c0_12, %c0_13] : memref<8x128x128xbf16, #tpu.memory_space<vmem>>, vector<1x128x128xbf16>
    %16 = vector.shape_cast %15 : vector<1x128x128xbf16> to vector<128x128xbf16>
    %cst_14 = arith.constant dense<0.000000e+00> : vector<32x128xf32>
    %17 = tpu.matmul %14, %16, %cst_14 {dimension_numbers = #tpu.dot_dimension_numbers<[1], [0], [0], [1], [0, 0, 1, 1], [], []>} : vector<32x128xbf16>, vector<128x128xbf16>, vector<32x128xf32> -> vector<32x128xf32>
    %c1_15 = arith.constant 1 : index
    %c0_16 = arith.constant 0 : index
    %c0_17 = arith.constant 0 : index
    %18 = vector.load %arg3[%c1_15, %c0_16, %c0_17] : memref<8x1x128xf32, #tpu.memory_space<vmem>>, vector<1x1x128xf32>
    %19 = vector.shape_cast %18 : vector<1x1x128xf32> to vector<1x128xf32>
    %20 = vector.broadcast %19 : vector<1x128xf32> to vector<32x128xf32>
    %21 = arith.addf %17, %20 : vector<32x128xf32>
    %cst_18 = arith.constant 0.000000e+00 : f32
    %22 = vector.broadcast %cst_18 : f32 to vector<32x128xf32>
    %23 = arith.maximumf %21, %22 : vector<32x128xf32>
    %24 = arith.truncf %23 : vector<32x128xf32> to vector<32x128xbf16>
    %cst_19 = arith.constant dense<0.000000e+00> : vector<32x128xf32>
    %25 = tpu.matmul %0, %24, %cst_19 {dimension_numbers = #tpu.dot_dimension_numbers<[1], [0], [0], [1], [0, 0, 1, 1], [], []>} : vector<32x32xbf16>, vector<32x128xbf16>, vector<32x128xf32> -> vector<32x128xf32>
    %26 = arith.truncf %25 : vector<32x128xf32> to vector<32x128xbf16>
    %c2 = arith.constant 2 : index
    %c0_20 = arith.constant 0 : index
    %c0_21 = arith.constant 0 : index
    %27 = vector.load %arg2[%c2, %c0_20, %c0_21] : memref<8x128x128xbf16, #tpu.memory_space<vmem>>, vector<1x128x128xbf16>
    %28 = vector.shape_cast %27 : vector<1x128x128xbf16> to vector<128x128xbf16>
    %cst_22 = arith.constant dense<0.000000e+00> : vector<32x128xf32>
    %29 = tpu.matmul %26, %28, %cst_22 {dimension_numbers = #tpu.dot_dimension_numbers<[1], [0], [0], [1], [0, 0, 1, 1], [], []>} : vector<32x128xbf16>, vector<128x128xbf16>, vector<32x128xf32> -> vector<32x128xf32>
    %c2_23 = arith.constant 2 : index
    %c0_24 = arith.constant 0 : index
    %c0_25 = arith.constant 0 : index
    %30 = vector.load %arg3[%c2_23, %c0_24, %c0_25] : memref<8x1x128xf32, #tpu.memory_space<vmem>>, vector<1x1x128xf32>
    %31 = vector.shape_cast %30 : vector<1x1x128xf32> to vector<1x128xf32>
    %32 = vector.broadcast %31 : vector<1x128xf32> to vector<32x128xf32>
    %33 = arith.addf %29, %32 : vector<32x128xf32>
    %cst_26 = arith.constant 0.000000e+00 : f32
    %34 = vector.broadcast %cst_26 : f32 to vector<32x128xf32>
    %35 = arith.maximumf %33, %34 : vector<32x128xf32>
    %36 = arith.truncf %35 : vector<32x128xf32> to vector<32x128xbf16>
    %c3 = arith.constant 3 : index
    %c0_27 = arith.constant 0 : index
    %c0_28 = arith.constant 0 : index
    %37 = vector.load %arg2[%c3, %c0_27, %c0_28] : memref<8x128x128xbf16, #tpu.memory_space<vmem>>, vector<1x128x128xbf16>
    %38 = vector.shape_cast %37 : vector<1x128x128xbf16> to vector<128x128xbf16>
    %cst_29 = arith.constant dense<0.000000e+00> : vector<32x128xf32>
    %39 = tpu.matmul %36, %38, %cst_29 {dimension_numbers = #tpu.dot_dimension_numbers<[1], [0], [0], [1], [0, 0, 1, 1], [], []>} : vector<32x128xbf16>, vector<128x128xbf16>, vector<32x128xf32> -> vector<32x128xf32>
    %c3_30 = arith.constant 3 : index
    %c0_31 = arith.constant 0 : index
    %c0_32 = arith.constant 0 : index
    %40 = vector.load %arg3[%c3_30, %c0_31, %c0_32] : memref<8x1x128xf32, #tpu.memory_space<vmem>>, vector<1x1x128xf32>
    %41 = vector.shape_cast %40 : vector<1x1x128xf32> to vector<1x128xf32>
    %42 = vector.broadcast %41 : vector<1x128xf32> to vector<32x128xf32>
    %43 = arith.addf %39, %42 : vector<32x128xf32>
    %cst_33 = arith.constant 0.000000e+00 : f32
    %44 = vector.broadcast %cst_33 : f32 to vector<32x128xf32>
    %45 = arith.maximumf %43, %44 : vector<32x128xf32>
    %46 = arith.truncf %45 : vector<32x128xf32> to vector<32x128xbf16>
    %cst_34 = arith.constant dense<0.000000e+00> : vector<32x128xf32>
    %47 = tpu.matmul %0, %46, %cst_34 {dimension_numbers = #tpu.dot_dimension_numbers<[1], [0], [0], [1], [0, 0, 1, 1], [], []>} : vector<32x32xbf16>, vector<32x128xbf16>, vector<32x128xf32> -> vector<32x128xf32>
    %48 = arith.truncf %47 : vector<32x128xf32> to vector<32x128xbf16>
    %c4 = arith.constant 4 : index
    %c0_35 = arith.constant 0 : index
    %c0_36 = arith.constant 0 : index
    %49 = vector.load %arg2[%c4, %c0_35, %c0_36] : memref<8x128x128xbf16, #tpu.memory_space<vmem>>, vector<1x128x128xbf16>
    %50 = vector.shape_cast %49 : vector<1x128x128xbf16> to vector<128x128xbf16>
    %cst_37 = arith.constant dense<0.000000e+00> : vector<32x128xf32>
    %51 = tpu.matmul %48, %50, %cst_37 {dimension_numbers = #tpu.dot_dimension_numbers<[1], [0], [0], [1], [0, 0, 1, 1], [], []>} : vector<32x128xbf16>, vector<128x128xbf16>, vector<32x128xf32> -> vector<32x128xf32>
    %c4_38 = arith.constant 4 : index
    %c0_39 = arith.constant 0 : index
    %c0_40 = arith.constant 0 : index
    %52 = vector.load %arg3[%c4_38, %c0_39, %c0_40] : memref<8x1x128xf32, #tpu.memory_space<vmem>>, vector<1x1x128xf32>
    %53 = vector.shape_cast %52 : vector<1x1x128xf32> to vector<1x128xf32>
    %54 = vector.broadcast %53 : vector<1x128xf32> to vector<32x128xf32>
    %55 = arith.addf %51, %54 : vector<32x128xf32>
    %cst_41 = arith.constant 0.000000e+00 : f32
    %56 = vector.broadcast %cst_41 : f32 to vector<32x128xf32>
    %57 = arith.maximumf %55, %56 : vector<32x128xf32>
    %58 = arith.truncf %57 : vector<32x128xf32> to vector<32x128xbf16>
    %c5 = arith.constant 5 : index
    %c0_42 = arith.constant 0 : index
    %c0_43 = arith.constant 0 : index
    %59 = vector.load %arg2[%c5, %c0_42, %c0_43] : memref<8x128x128xbf16, #tpu.memory_space<vmem>>, vector<1x128x128xbf16>
    %60 = vector.shape_cast %59 : vector<1x128x128xbf16> to vector<128x128xbf16>
    %cst_44 = arith.constant dense<0.000000e+00> : vector<32x128xf32>
    %61 = tpu.matmul %58, %60, %cst_44 {dimension_numbers = #tpu.dot_dimension_numbers<[1], [0], [0], [1], [0, 0, 1, 1], [], []>} : vector<32x128xbf16>, vector<128x128xbf16>, vector<32x128xf32> -> vector<32x128xf32>
    %c5_45 = arith.constant 5 : index
    %c0_46 = arith.constant 0 : index
    %c0_47 = arith.constant 0 : index
    %62 = vector.load %arg3[%c5_45, %c0_46, %c0_47] : memref<8x1x128xf32, #tpu.memory_space<vmem>>, vector<1x1x128xf32>
    %63 = vector.shape_cast %62 : vector<1x1x128xf32> to vector<1x128xf32>
    %64 = vector.broadcast %63 : vector<1x128xf32> to vector<32x128xf32>
    %65 = arith.addf %61, %64 : vector<32x128xf32>
    %cst_48 = arith.constant 0.000000e+00 : f32
    %66 = vector.broadcast %cst_48 : f32 to vector<32x128xf32>
    %67 = arith.maximumf %65, %66 : vector<32x128xf32>
    %68 = arith.truncf %67 : vector<32x128xf32> to vector<32x128xbf16>
    %cst_49 = arith.constant dense<0.000000e+00> : vector<8x128xf32>
    %69 = tpu.matmul %1, %68, %cst_49 {dimension_numbers = #tpu.dot_dimension_numbers<[1], [0], [0], [1], [0, 0, 1, 1], [], []>} : vector<8x32xbf16>, vector<32x128xbf16>, vector<8x128xf32> -> vector<8x128xf32>
    %70 = arith.truncf %69 : vector<8x128xf32> to vector<8x128xbf16>
    %c6 = arith.constant 6 : index
    %c0_50 = arith.constant 0 : index
    %c0_51 = arith.constant 0 : index
    %71 = vector.load %arg2[%c6, %c0_50, %c0_51] : memref<8x128x128xbf16, #tpu.memory_space<vmem>>, vector<1x128x128xbf16>
    %72 = vector.shape_cast %71 : vector<1x128x128xbf16> to vector<128x128xbf16>
    %cst_52 = arith.constant dense<0.000000e+00> : vector<8x128xf32>
    %73 = tpu.matmul %70, %72, %cst_52 {dimension_numbers = #tpu.dot_dimension_numbers<[1], [0], [0], [1], [0, 0, 1, 1], [], []>} : vector<8x128xbf16>, vector<128x128xbf16>, vector<8x128xf32> -> vector<8x128xf32>
    %c6_53 = arith.constant 6 : index
    %c0_54 = arith.constant 0 : index
    %c0_55 = arith.constant 0 : index
    %74 = vector.load %arg3[%c6_53, %c0_54, %c0_55] : memref<8x1x128xf32, #tpu.memory_space<vmem>>, vector<1x1x128xf32>
    %75 = vector.shape_cast %74 : vector<1x1x128xf32> to vector<1x128xf32>
    %76 = vector.broadcast %75 : vector<1x128xf32> to vector<8x128xf32>
    %77 = arith.addf %73, %76 : vector<8x128xf32>
    %cst_56 = arith.constant 0.000000e+00 : f32
    %78 = vector.broadcast %cst_56 : f32 to vector<8x128xf32>
    %79 = arith.maximumf %77, %78 : vector<8x128xf32>
    %80 = arith.truncf %79 : vector<8x128xf32> to vector<8x128xbf16>
    %c7 = arith.constant 7 : index
    %c0_57 = arith.constant 0 : index
    %c0_58 = arith.constant 0 : index
    %81 = vector.load %arg2[%c7, %c0_57, %c0_58] : memref<8x128x128xbf16, #tpu.memory_space<vmem>>, vector<1x128x128xbf16>
    %82 = vector.shape_cast %81 : vector<1x128x128xbf16> to vector<128x128xbf16>
    %cst_59 = arith.constant dense<0.000000e+00> : vector<8x128xf32>
    %83 = tpu.matmul %80, %82, %cst_59 {dimension_numbers = #tpu.dot_dimension_numbers<[1], [0], [0], [1], [0, 0, 1, 1], [], []>} : vector<8x128xbf16>, vector<128x128xbf16>, vector<8x128xf32> -> vector<8x128xf32>
    %c7_60 = arith.constant 7 : index
    %c0_61 = arith.constant 0 : index
    %c0_62 = arith.constant 0 : index
    %84 = vector.load %arg3[%c7_60, %c0_61, %c0_62] : memref<8x1x128xf32, #tpu.memory_space<vmem>>, vector<1x1x128xf32>
    %85 = vector.shape_cast %84 : vector<1x1x128xf32> to vector<1x128xf32>
    %86 = vector.broadcast %85 : vector<1x128xf32> to vector<8x128xf32>
    %87 = arith.addf %83, %86 : vector<8x128xf32>
    %c0_63 = arith.constant 0 : index
    %c0_64 = arith.constant 0 : index
    %88 = vector.load %arg4[%c0_63, %c0_64] : memref<8x128xf32, #tpu.memory_space<vmem>>, vector<8x128xf32>
    tpu.vector_store %arg4[%c0_63, %c0_64], %87 {strides = array<i32>} : memref<8x128xf32, #tpu.memory_space<vmem>>, vector<8x128xf32>,
    return
  }
}

</mosaic_0001>

<llo_original>
// kernel: tpu_custom_call.1
$region0: #{tpu_custom_call.1}
  #allocation0 [shape = 'u32[]', space=smem, size = 0x4, offset = 0x4, fixed_abs, tag = 'smem constant byte address 0x4 - core index']
  #allocation1 [shape = 'u32[144,128]{1,0:T(1,128)}', space=vmem, size = 0x12000, scoped, tag = 'internal scratch']
  %s0 = inlined_call_operand.vmem [shape: bf16[40,32], index: 0, kind: input, shape index: {}]
  %s1 = inlined_call_operand.vmem [shape: bf16[32,128], index: 1, kind: input, shape index: {}]
  %s2 = inlined_call_operand.hbm [shape: bf16[8,128,128], index: 2, kind: input, shape index: {}]
  %s3 = inlined_call_operand.vmem [shape: f32[8,1,128], index: 3, kind: input, shape index: {}]
  %s4 = inlined_call_operand.hbm [shape: f32[8,128], index: 4, kind: output, shape index: {}]
  %s5 = sld [smem:[#allocation0]]
  $region30: #{tpu_custom_call.1} parent=0
    _
  %s7 = ssub.s32 1, %s5
  %s8 = scalar_select 0, %s7, %s5
  $region1: #{tpu_custom_call.1} parent=0
    #allocation2 [shape = 'u8[262144]{0}', space=vmem, size = 0x40000, scoped, tag = 'input window, operand 2, single buffered']
    #allocation3 [shape = 's32[1]{0}', space=sflag, size = 0x4, scoped, tag = 'scoped memory for tpu_custom_call.1']
    #allocation4 [shape = 's32[1]{0}', space=sflag, size = 0x4, scoped, tag = 'scoped memory for tpu_custom_call.1']
    #allocation5 [shape = 'u8[4096]{0}', space=vmem, size = 0x1000, scoped, tag = 'output window, operand 0, single buffered']
    %9 = vsyncpa [#allocation3], 0
    %10 = vsyncpa [#allocation4], 0
    // Predicated region
    $region2: #{tpu_custom_call.1} parent=1 // pred_check
      _
    $region3: #{tpu_custom_call.1} parent=1 // pred_check_branch
      %12 = sbr.rel (0) target = $region5
    $region4: #{tpu_custom_call.1} parent=1 // pred_region
      _
    $region5: #{tpu_custom_call.1} parent=1 // pred_fallthru
      _
    // Predicated region
    $region6: #{tpu_custom_call.1} parent=1 // pred_check
      _
    $region7: #{tpu_custom_call.1} parent=1 // pred_check_branch
      %14 = sbr.rel (0) target = $region9
    $region8: #{tpu_custom_call.1} parent=1 // pred_region
      _
    $region9: #{tpu_custom_call.1} parent=1 // pred_fallthru
      _
    // Predicated region
    $region10: #{tpu_custom_call.1} parent=1 // pred_check
      _
    $region11: #{tpu_custom_call.1} parent=1 // pred_check_branch
      %16 = sbr.rel (0) target = $region13
    $region12: #{tpu_custom_call.1} parent=1 // pred_region
      %s18 = ssub.s32 8192, 8192
      %19 = vsyncadd [#allocation3], %s18
      %s20 = sshll.u32 [#allocation2], 4
      %s21 = int_to_ptr.vmem [resolvable:$true] %s20
      %26 = dma.hbm_to_vmem [thread:$0]  %s2, 8192, %s21, [#allocation3], 64, 64, 4
    $region13: #{tpu_custom_call.1} parent=1 // pred_fallthru
      _
    // Predicated region
    $region14: #{tpu_custom_call.1} parent=1 // pred_check
      _
    $region15: #{tpu_custom_call.1} parent=1 // pred_check_branch
      %28 = sbr.rel (0) target = $region17
    $region16: #{tpu_custom_call.1} parent=1 // pred_region
      _
    $region17: #{tpu_custom_call.1} parent=1 // pred_fallthru
      _
    // Predicated region
    $region18: #{tpu_custom_call.1} parent=1 // pred_check
      _
    $region19: #{tpu_custom_call.1} parent=1 // pred_check_branch
      %30 = sbr.rel (0) target = $region21
    $region20: #{tpu_custom_call.1} parent=1 // pred_region
      %31 = dma.done [#allocation3], 8192
    $region21: #{tpu_custom_call.1} parent=1 // pred_fallthru
      _
    %v33 = vld [vmem:[%s0] sm:$0xf]
    %v34 = vld [vmem:[%s0 + $0x4] sm:$0xf]
    %v35 = vld [vmem:[%s0 + $0x8] sm:$0xf]
    %v36 = vld [vmem:[%s0 + $0xc] sm:$0xf]
    %v37 = vld [vmem:[%s0 + $0x10] sm:$0xf]
    %v38 = vld [vmem:[%s1] sm:$0xf]
    %v39 = vld [vmem:[%s1 + $0x4] sm:$0xf]
    %v40 = vld [vmem:[%s1 + $0x8] sm:$0xf]
    %v41 = vld [vmem:[%s1 + $0xc] sm:$0xf]
    %v46 = vunpack.c.l.b16 %v33
    %v47 = vunpack.c.l.b16 %v34
    %v48 = vunpack.c.l.b16 %v35
    %v49 = vunpack.c.l.b16 %v36
    %v50 = vpack.c.b16 %v47, %v46
    %v51 = vpack.c.b16 %v49, %v48
    %v56 = vunpack.c.l.b16 %v38
    %v57 = vunpack.c.l.b16 %v39
    %v58 = vunpack.c.l.b16 %v40
    %v59 = vunpack.c.l.b16 %v41
    %v60 = vpack.c.b16 %v57, %v56
    %v61 = vpack.c.b16 %v59, %v58
    %vm64 = vcmask 261120
    %v66 = vsel %vm64, %v50, 0
    %v69 = vsel %vm64, %v51, 0
    %71 = vmatprep.subr.bf16.mxu0 0
    %72 = vmatpush1.bf16.msra.mxu0 0
    %73 = vmatprep.subr.bf16.mxu0 0
    %74 = vmatpush1.bf16.msra.mxu0 0
    %75 = vmatprep.subr.bf16.mxu0 0
    %76 = vmatpush1.bf16.msra.mxu0 0
    %77 = vmatprep.subr.bf16.mxu0 0
    %78 = vmatpush1.bf16.msra.mxu0 0
    %79 = vmatprep.subr.bf16.mxu0 0
    %80 = vmatpush1.bf16.msra.mxu0 0
    %81 = vmatprep.subr.bf16.mxu0 0
    %82 = vmatpush1.bf16.msra.mxu0 0
    %83 = vmatprep.subr.bf16.mxu0 0
    %84 = vmatpush1.bf16.msra.mxu0 %v61
    %85 = vmatprep.subr.bf16.mxu0 0
    %86 = vmatpush1.bf16.msra.mxu0 %v60
    %87 = vmatprep.subr.bf16.mxu0 0
    %88 = vmatpush2.bf16.msra.mxu0 0
    %89 = vmatprep.subr.bf16.mxu0 0
    %90 = vmatpush2.bf16.msra.mxu0 0
    %91 = vmatprep.subr.bf16.mxu0 0
    %92 = vmatpush2.bf16.msra.mxu0 0
    %93 = vmatprep.subr.bf16.mxu0 0
    %94 = vmatpush2.bf16.msra.mxu0 0
    %95 = vmatprep.subr.bf16.mxu0 0
    %96 = vmatpush2.bf16.msra.mxu0 0
    %97 = vmatprep.subr.bf16.mxu0 0
    %98 = vmatpush2.bf16.msra.mxu0 0
    %99 = vmatprep.subr.bf16.mxu0 0
    %100 = vmatpush2.bf16.msra.mxu0 0
    %101 = vmatprep.subr.bf16.mxu0 0
    %102 = vmatpush2.bf16.msra.mxu0 0
    %103 = vmatprep.mubr.bf16.mxu0 0
    %104 = vmatmul.mubr.bf16.gmra.mxu0 %v66
    %v105 = vpop.f32.mrf.mxu0
    %v106 = vadd.f32 0.0, %v105
    %v107 = vpop.f32.mrf.mxu0
    %v108 = vpop.f32.mrf.mxu0
    %v109 = vadd.f32 0.0, %v108
    %v110 = vpop.f32.mrf.mxu0
    %111 = vmatprep.mubr.bf16.mxu0 0
    %112 = vmatmul.mubr.bf16.gmra.mxu0 %v69
    %v113 = vpop.f32.mrf.mxu0
    %v114 = vadd.f32 0.0, %v113
    %v115 = vpop.f32.mrf.mxu0
    %v116 = vpop.f32.mrf.mxu0
    %v117 = vadd.f32 0.0, %v116
    %v118 = vpop.f32.mrf.mxu0
    %119 = vdwg.mxu0
    %v120 = vpack.c.bf16 %v109, %v106
    %v121 = vpack.c.bf16 %v117, %v114
    %v122 = vld [vmem:[#allocation2] sm:$0xf]
    %v123 = vld [vmem:[#allocation2 + $0x4] sm:$0xf]
    %v124 = vld [vmem:[#allocation2 + $0x8] sm:$0xf]
    %v125 = vld [vmem:[#allocation2 + $0xc] sm:$0xf]
    %v126 = vld [vmem:[#allocation2 + $0x10] sm:$0xf]
    %v127 = vld [vmem:[#allocation2 + $0x14] sm:$0xf]
    %v128 = vld [vmem:[#allocation2 + $0x18] sm:$0xf]
    %v129 = vld [vmem:[#allocation2 + $0x1c] sm:$0xf]
    %v130 = vld [vmem:[#allocation2 + $0x20] sm:$0xf]
    %v131 = vld [vmem:[#allocation2 + $0x24] sm:$0xf]
    %v132 = vld [vmem:[#allocation2 + $0x28] sm:$0xf]
    %v133 = vld [vmem:[#allocation2 + $0x2c] sm:$0xf]
    %v134 = vld [vmem:[#allocation2 + $0x30] sm:$0xf]
    %v135 = vld [vmem:[#allocation2 + $0x34] sm:$0xf]
    %v136 = vld [vmem:[#allocation2 + $0x38] sm:$0xf]
    %v137 = vld [vmem:[#allocation2 + $0x3c] sm:$0xf]
    %v138 = vld [vmem:[%s3] sm:$0x1]
    %v140 = vlaneseq
    %v141 = vshrl.u32 %v140, 7
    %v142 = vsub.s32 0, %v141
    %v143 = vrot.slane %v138, %v142
    %v161 = vunpack.c.l.b16 %v122
    %v162 = vunpack.c.l.b16 %v123
    %v163 = vunpack.c.l.b16 %v124
    %v164 = vunpack.c.l.b16 %v125
    %v165 = vunpack.c.l.b16 %v126
    %v166 = vunpack.c.l.b16 %v127
    %v167 = vunpack.c.l.b16 %v128
    %v168 = vunpack.c.l.b16 %v129
    %v169 = vunpack.c.l.b16 %v130
    %v170 = vunpack.c.l.b16 %v131
    %v171 = vunpack.c.l.b16 %v132
    %v172 = vunpack.c.l.b16 %v133
    %v173 = vunpack.c.l.b16 %v134
    %v174 = vunpack.c.l.b16 %v135
    %v175 = vunpack.c.l.b16 %v136
    %v176 = vunpack.c.l.b16 %v137
    %v177 = vpack.c.b16 %v162, %v161
    %v178 = vpack.c.b16 %v164, %v163
    %v179 = vpack.c.b16 %v166, %v165
    %v180 = vpack.c.b16 %v168, %v167
    %v181 = vpack.c.b16 %v170, %v169
    %v182 = vpack.c.b16 %v172, %v171
    %v183 = vpack.c.b16 %v174, %v173
    %v184 = vpack.c.b16 %v176, %v175
    %193 = vmatprep.subr.bf16.mxu0 0
    %194 = vmatpush1.bf16.msra.mxu0 %v184
    %195 = vmatprep.subr.bf16.mxu0 0
    %196 = vmatpush1.bf16.msra.mxu0 %v183
    %197 = vmatprep.subr.bf16.mxu0 0
    %198 = vmatpush1.bf16.msra.mxu0 %v182
    %199 = vmatprep.subr.bf16.mxu0 0
    %200 = vmatpush1.bf16.msra.mxu0 %v181
    %201 = vmatprep.subr.bf16.mxu0 0
    %202 = vmatpush1.bf16.msra.mxu0 %v180
    %203 = vmatprep.subr.bf16.mxu0 0
    %204 = vmatpush1.bf16.msra.mxu0 %v179
    %205 = vmatprep.subr.bf16.mxu0 0
    %206 = vmatpush1.bf16.msra.mxu0 %v178
    %207 = vmatprep.subr.bf16.mxu0 0
    %208 = vmatpush1.bf16.msra.mxu0 %v177
    %209 = vmatprep.subr.bf16.mxu0 0
    %210 = vmatpush2.bf16.msra.mxu0 0
    %211 = vmatprep.subr.bf16.mxu0 0
    %212 = vmatpush2.bf16.msra.mxu0 0
    %213 = vmatprep.subr.bf16.mxu0 0
    %214 = vmatpush2.bf16.msra.mxu0 0
    %215 = vmatprep.subr.bf16.mxu0 0
    %216 = vmatpush2.bf16.msra.mxu0 0
    %217 = vmatprep.subr.bf16.mxu0 0
    %218 = vmatpush2.bf16.msra.mxu0 0
    %219 = vmatprep.subr.bf16.mxu0 0
    %220 = vmatpush2.bf16.msra.mxu0 0
    %221 = vmatprep.subr.bf16.mxu0 0
    %222 = vmatpush2.bf16.msra.mxu0 0
    %223 = vmatprep.subr.bf16.mxu0 0
    %224 = vmatpush2.bf16.msra.mxu0 0
    %225 = vmatprep.mubr.bf16.mxu0 0
    %226 = vmatmul.mubr.bf16.gmra.mxu0 %v120
    %v227 = vpop.f32.mrf.mxu0
    %v228 = vadd.f32 %v143, %v227
    %v229 = vpop.f32.mrf.mxu0
    %v230 = vpop.f32.mrf.mxu0
    %v231 = vadd.f32 %v143, %v230
    %v232 = vpop.f32.mrf.mxu0
    %233 = vmatprep.mubr.bf16.mxu0 0
    %234 = vmatmul.mubr.bf16.gmra.mxu0 %v121
    %v235 = vpop.f32.mrf.mxu0
    %v236 = vadd.f32 %v143, %v235
    %v237 = vpop.f32.mrf.mxu0
    %v238 = vpop.f32.mrf.mxu0
    %v239 = vadd.f32 %v143, %v238
    %v240 = vpop.f32.mrf.mxu0
    %241 = vdwg.mxu0
    %v242 = vmax.f32 %v228, 0.0
    %v243 = vmax.f32 %v231, 0.0
    %v244 = vmax.f32 %v236, 0.0
    %v245 = vmax.f32 %v239, 0.0
    %v246 = vpack.c.bf16 %v243, %v242
    %v247 = vpack.c.bf16 %v245, %v244
    %s248 = scalar_lea.vmem [#allocation2], 64
    %v249 = vld [vmem:[%s248] sm:$0xf]
    %v250 = vld [vmem:[%s248 + $0x4] sm:$0xf]
    %v251 = vld [vmem:[%s248 + $0x8] sm:$0xf]
    %v252 = vld [vmem:[%s248 + $0xc] sm:$0xf]
    %v253 = vld [vmem:[%s248 + $0x10] sm:$0xf]
    %v254 = vld [vmem:[%s248 + $0x14] sm:$0xf]
    %v255 = vld [vmem:[%s248 + $0x18] sm:$0xf]
    %v256 = vld [vmem:[%s248 + $0x1c] sm:$0xf]
    %v257 = vld [vmem:[%s248 + $0x20] sm:$0xf]
    %v258 = vld [vmem:[%s248 + $0x24] sm:$0xf]
    %v259 = vld [vmem:[%s248 + $0x28] sm:$0xf]
    %v260 = vld [vmem:[%s248 + $0x2c] sm:$0xf]
    %v261 = vld [vmem:[%s248 + $0x30] sm:$0xf]
    %v262 = vld [vmem:[%s248 + $0x34] sm:$0xf]
    %v263 = vld [vmem:[%s248 + $0x38] sm:$0xf]
    %v264 = vld [vmem:[%s248 + $0x3c] sm:$0xf]
    %s265 = scalar_lea.vmem %s3, 1
    %v266 = vld [vmem:[%s265] sm:$0x1]
    %v268 = vlaneseq
    %v269 = vshrl.u32 %v268, 7
    %v270 = vsub.s32 0, %v269
    %v271 = vrot.slane %v266, %v270
    %v289 = vunpack.c.l.b16 %v249
    %v290 = vunpack.c.l.b16 %v250
    %v291 = vunpack.c.l.b16 %v251
    %v292 = vunpack.c.l.b16 %v252
    %v293 = vunpack.c.l.b16 %v253
    %v294 = vunpack.c.l.b16 %v254
    %v295 = vunpack.c.l.b16 %v255
    %v296 = vunpack.c.l.b16 %v256
    %v297 = vunpack.c.l.b16 %v257
    %v298 = vunpack.c.l.b16 %v258
    %v299 = vunpack.c.l.b16 %v259
    %v300 = vunpack.c.l.b16 %v260
    %v301 = vunpack.c.l.b16 %v261
    %v302 = vunpack.c.l.b16 %v262
    %v303 = vunpack.c.l.b16 %v263
    %v304 = vunpack.c.l.b16 %v264
    %v305 = vpack.c.b16 %v290, %v289
    %v306 = vpack.c.b16 %v292, %v291
    %v307 = vpack.c.b16 %v294, %v293
    %v308 = vpack.c.b16 %v296, %v295
    %v309 = vpack.c.b16 %v298, %v297
    %v310 = vpack.c.b16 %v300, %v299
    %v311 = vpack.c.b16 %v302, %v301
    %v312 = vpack.c.b16 %v304, %v303
    %321 = vmatprep.subr.bf16.mxu0 0
    %322 = vmatpush1.bf16.msra.mxu0 %v312
    %323 = vmatprep.subr.bf16.mxu0 0
    %324 = vmatpush1.bf16.msra.mxu0 %v311
    %325 = vmatprep.subr.bf16.mxu0 0
    %326 = vmatpush1.bf16.msra.mxu0 %v310
    %327 = vmatprep.subr.bf16.mxu0 0
    %328 = vmatpush1.bf16.msra.mxu0 %v309
    %329 = vmatprep.subr.bf16.mxu0 0
    %330 = vmatpush1.bf16.msra.mxu0 %v308
    %331 = vmatprep.subr.bf16.mxu0 0
    %332 = vmatpush1.bf16.msra.mxu0 %v307
    %333 = vmatprep.subr.bf16.mxu0 0
    %334 = vmatpush1.bf16.msra.mxu0 %v306
    %335 = vmatprep.subr.bf16.mxu0 0
    %336 = vmatpush1.bf16.msra.mxu0 %v305
    %337 = vmatprep.subr.bf16.mxu0 0
    %338 = vmatpush2.bf16.msra.mxu0 0
    %339 = vmatprep.subr.bf16.mxu0 0
    %340 = vmatpush2.bf16.msra.mxu0 0
    %341 = vmatprep.subr.bf16.mxu0 0
    %342 = vmatpush2.bf16.msra.mxu0 0
    %343 = vmatprep.subr.bf16.mxu0 0
    %344 = vmatpush2.bf16.msra.mxu0 0
    %345 = vmatprep.subr.bf16.mxu0 0
    %346 = vmatpush2.bf16.msra.mxu0 0
    %347 = vmatprep.subr.bf16.mxu0 0
    %348 = vmatpush2.bf16.msra.mxu0 0
    %349 = vmatprep.subr.bf16.mxu0 0
    %350 = vmatpush2.bf16.msra.mxu0 0
    %351 = vmatprep.subr.bf16.mxu0 0
    %352 = vmatpush2.bf16.msra.mxu0 0
    %353 = vmatprep.mubr.bf16.mxu0 0
    %354 = vmatmul.mubr.bf16.gmra.mxu0 %v246
    %v355 = vpop.f32.mrf.mxu0
    %v356 = vadd.f32 %v271, %v355
    %v357 = vpop.f32.mrf.mxu0
    %v358 = vpop.f32.mrf.mxu0
    %v359 = vadd.f32 %v271, %v358
    %v360 = vpop.f32.mrf.mxu0
    %361 = vmatprep.mubr.bf16.mxu0 0
    %362 = vmatmul.mubr.bf16.gmra.mxu0 %v247
    %v363 = vpop.f32.mrf.mxu0
    %v364 = vadd.f32 %v271, %v363
    %v365 = vpop.f32.mrf.mxu0
    %v366 = vpop.f32.mrf.mxu0
    %v367 = vadd.f32 %v271, %v366
    %v368 = vpop.f32.mrf.mxu0
    %369 = vdwg.mxu0
    %v370 = vmax.f32 %v356, 0.0
    %v371 = vmax.f32 %v359, 0.0
    %v372 = vmax.f32 %v364, 0.0
    %v373 = vmax.f32 %v367, 0.0
    %v374 = vpack.c.bf16 %v371, %v370
    %v375 = vpack.c.bf16 %v373, %v372
    %376 = vmatprep.subr.bf16.mxu0 0
    %377 = vmatpush1.bf16.msra.mxu0 0
    %378 = vmatprep.subr.bf16.mxu0 0
    %379 = vmatpush1.bf16.msra.mxu0 0
    %380 = vmatprep.subr.bf16.mxu0 0
    %381 = vmatpush1.bf16.msra.mxu0 0
    %382 = vmatprep.subr.bf16.mxu0 0
    %383 = vmatpush1.bf16.msra.mxu0 0
    %384 = vmatprep.subr.bf16.mxu0 0
    %385 = vmatpush1.bf16.msra.mxu0 0
    %386 = vmatprep.subr.bf16.mxu0 0
    %387 = vmatpush1.bf16.msra.mxu0 0
    %388 = vmatprep.subr.bf16.mxu0 0
    %389 = vmatpush1.bf16.msra.mxu0 %v375
    %390 = vmatprep.subr.bf16.mxu0 0
    %391 = vmatpush1.bf16.msra.mxu0 %v374
    %392 = vmatprep.subr.bf16.mxu0 0
    %393 = vmatpush2.bf16.msra.mxu0 0
    %394 = vmatprep.subr.bf16.mxu0 0
    %395 = vmatpush2.bf16.msra.mxu0 0
    %396 = vmatprep.subr.bf16.mxu0 0
    %397 = vmatpush2.bf16.msra.mxu0 0
    %398 = vmatprep.subr.bf16.mxu0 0
    %399 = vmatpush2.bf16.msra.mxu0 0
    %400 = vmatprep.subr.bf16.mxu0 0
    %401 = vmatpush2.bf16.msra.mxu0 0
    %402 = vmatprep.subr.bf16.mxu0 0
    %403 = vmatpush2.bf16.msra.mxu0 0
    %404 = vmatprep.subr.bf16.mxu0 0
    %405 = vmatpush2.bf16.msra.mxu0 0
    %406 = vmatprep.subr.bf16.mxu0 0
    %407 = vmatpush2.bf16.msra.mxu0 0
    %408 = vmatprep.mubr.bf16.mxu0 0
    %409 = vmatmul.mubr.bf16.gmra.mxu0 %v66
    %v410 = vpop.f32.mrf.mxu0
    %v411 = vadd.f32 0.0, %v410
    %v412 = vpop.f32.mrf.mxu0
    %v413 = vpop.f32.mrf.mxu0
    %v414 = vadd.f32 0.0, %v413
    %v415 = vpop.f32.mrf.mxu0
    %416 = vmatprep.mubr.bf16.mxu0 0
    %417 = vmatmul.mubr.bf16.gmra.mxu0 %v69
    %v418 = vpop.f32.mrf.mxu0
    %v419 = vadd.f32 0.0, %v418
    %v420 = vpop.f32.mrf.mxu0
    %v421 = vpop.f32.mrf.mxu0
    %v422 = vadd.f32 0.0, %v421
    %v423 = vpop.f32.mrf.mxu0
    %424 = vdwg.mxu0
    %v425 = vpack.c.bf16 %v414, %v411
    %v426 = vpack.c.bf16 %v422, %v419
    %s427 = scalar_lea.vmem [#allocation2], 128
    %v428 = vld [vmem:[%s427] sm:$0xf]
    %v429 = vld [vmem:[%s427 + $0x4] sm:$0xf]
    %v430 = vld [vmem:[%s427 + $0x8] sm:$0xf]
    %v431 = vld [vmem:[%s427 + $0xc] sm:$0xf]
    %v432 = vld [vmem:[%s427 + $0x10] sm:$0xf]
    %v433 = vld [vmem:[%s427 + $0x14] sm:$0xf]
    %v434 = vld [vmem:[%s427 + $0x18] sm:$0xf]
    %v435 = vld [vmem:[%s427 + $0x1c] sm:$0xf]
    %v436 = vld [vmem:[%s427 + $0x20] sm:$0xf]
    %v437 = vld [vmem:[%s427 + $0x24] sm:$0xf]
    %v438 = vld [vmem:[%s427 + $0x28] sm:$0xf]
    %v439 = vld [vmem:[%s427 + $0x2c] sm:$0xf]
    %v440 = vld [vmem:[%s427 + $0x30] sm:$0xf]
    %v441 = vld [vmem:[%s427 + $0x34] sm:$0xf]
    %v442 = vld [vmem:[%s427 + $0x38] sm:$0xf]
    %v443 = vld [vmem:[%s427 + $0x3c] sm:$0xf]
    %s444 = scalar_lea.vmem %s3, 2
    %v445 = vld [vmem:[%s444] sm:$0x1]
    %v447 = vlaneseq
    %v448 = vshrl.u32 %v447, 7
    %v449 = vsub.s32 0, %v448
    %v450 = vrot.slane %v445, %v449
    %v468 = vunpack.c.l.b16 %v428
    %v469 = vunpack.c.l.b16 %v429
    %v470 = vunpack.c.l.b16 %v430
    %v471 = vunpack.c.l.b16 %v431
    %v472 = vunpack.c.l.b16 %v432
    %v473 = vunpack.c.l.b16 %v433
    %v474 = vunpack.c.l.b16 %v434
    %v475 = vunpack.c.l.b16 %v435
    %v476 = vunpack.c.l.b16 %v436
    %v477 = vunpack.c.l.b16 %v437
    %v478 = vunpack.c.l.b16 %v438
    %v479 = vunpack.c.l.b16 %v439
    %v480 = vunpack.c.l.b16 %v440
    %v481 = vunpack.c.l.b16 %v441
    %v482 = vunpack.c.l.b16 %v442
    %v483 = vunpack.c.l.b16 %v443
    %v484 = vpack.c.b16 %v469, %v468
    %v485 = vpack.c.b16 %v471, %v470
    %v486 = vpack.c.b16 %v473, %v472
    %v487 = vpack.c.b16 %v475, %v474
    %v488 = vpack.c.b16 %v477, %v476
    %v489 = vpack.c.b16 %v479, %v478
    %v490 = vpack.c.b16 %v481, %v480
    %v491 = vpack.c.b16 %v483, %v482
    %500 = vmatprep.subr.bf16.mxu0 0
    %501 = vmatpush1.bf16.msra.mxu0 %v491
    %502 = vmatprep.subr.bf16.mxu0 0
    %503 = vmatpush1.bf16.msra.mxu0 %v490
    %504 = vmatprep.subr.bf16.mxu0 0
    %505 = vmatpush1.bf16.msra.mxu0 %v489
    %506 = vmatprep.subr.bf16.mxu0 0
    %507 = vmatpush1.bf16.msra.mxu0 %v488
    %508 = vmatprep.subr.bf16.mxu0 0
    %509 = vmatpush1.bf16.msra.mxu0 %v487
    %510 = vmatprep.subr.bf16.mxu0 0
    %511 = vmatpush1.bf16.msra.mxu0 %v486
    %512 = vmatprep.subr.bf16.mxu0 0
    %513 = vmatpush1.bf16.msra.mxu0 %v485
    %514 = vmatprep.subr.bf16.mxu0 0
    %515 = vmatpush1.bf16.msra.mxu0 %v484
    %516 = vmatprep.subr.bf16.mxu0 0
    %517 = vmatpush2.bf16.msra.mxu0 0
    %518 = vmatprep.subr.bf16.mxu0 0
    %519 = vmatpush2.bf16.msra.mxu0 0
    %520 = vmatprep.subr.bf16.mxu0 0
    %521 = vmatpush2.bf16.msra.mxu0 0
    %522 = vmatprep.subr.bf16.mxu0 0
    %523 = vmatpush2.bf16.msra.mxu0 0
    %524 = vmatprep.subr.bf16.mxu0 0
    %525 = vmatpush2.bf16.msra.mxu0 0
    %526 = vmatprep.subr.bf16.mxu0 0
    %527 = vmatpush2.bf16.msra.mxu0 0
    %528 = vmatprep.subr.bf16.mxu0 0
    %529 = vmatpush2.bf16.msra.mxu0 0
    %530 = vmatprep.subr.bf16.mxu0 0
    %531 = vmatpush2.bf16.msra.mxu0 0
    %532 = vmatprep.mubr.bf16.mxu0 0
    %533 = vmatmul.mubr.bf16.gmra.mxu0 %v425
    %v534 = vpop.f32.mrf.mxu0
    %v535 = vadd.f32 %v450, %v534
    %v536 = vpop.f32.mrf.mxu0
    %v537 = vpop.f32.mrf.mxu0
    %v538 = vadd.f32 %v450, %v537
    %v539 = vpop.f32.mrf.mxu0
    %540 = vmatprep.mubr.bf16.mxu0 0
    %541 = vmatmul.mubr.bf16.gmra.mxu0 %v426
    %v542 = vpop.f32.mrf.mxu0
    %v543 = vadd.f32 %v450, %v542
    %v544 = vpop.f32.mrf.mxu0
    %v545 = vpop.f32.mrf.mxu0
    %v546 = vadd.f32 %v450, %v545
    %v547 = vpop.f32.mrf.mxu0
    %548 = vdwg.mxu0
    %v549 = vmax.f32 %v535, 0.0
    %v550 = vmax.f32 %v538, 0.0
    %v551 = vmax.f32 %v543, 0.0
    %v552 = vmax.f32 %v546, 0.0
    %v553 = vpack.c.bf16 %v550, %v549
    %v554 = vpack.c.bf16 %v552, %v551
    %s555 = scalar_lea.vmem [#allocation2], 192
    %v556 = vld [vmem:[%s555] sm:$0xf]
    %v557 = vld [vmem:[%s555 + $0x4] sm:$0xf]
    %v558 = vld [vmem:[%s555 + $0x8] sm:$0xf]
    %v559 = vld [vmem:[%s555 + $0xc] sm:$0xf]
    %v560 = vld [vmem:[%s555 + $0x10] sm:$0xf]
    %v561 = vld [vmem:[%s555 + $0x14] sm:$0xf]
    %v562 = vld [vmem:[%s555 + $0x18] sm:$0xf]
    %v563 = vld [vmem:[%s555 + $0x1c] sm:$0xf]
    %v564 = vld [vmem:[%s555 + $0x20] sm:$0xf]
    %v565 = vld [vmem:[%s555 + $0x24] sm:$0xf]
    %v566 = vld [vmem:[%s555 + $0x28] sm:$0xf]
    %v567 = vld [vmem:[%s555 + $0x2c] sm:$0xf]
    %v568 = vld [vmem:[%s555 + $0x30] sm:$0xf]
    %v569 = vld [vmem:[%s555 + $0x34] sm:$0xf]
    %v570 = vld [vmem:[%s555 + $0x38] sm:$0xf]
    %v571 = vld [vmem:[%s555 + $0x3c] sm:$0xf]
    %s572 = scalar_lea.vmem %s3, 3
    %v573 = vld [vmem:[%s572] sm:$0x1]
    %v575 = vlaneseq
    %v576 = vshrl.u32 %v575, 7
    %v577 = vsub.s32 0, %v576
    %v578 = vrot.slane %v573, %v577
    %v596 = vunpack.c.l.b16 %v556
    %v597 = vunpack.c.l.b16 %v557
    %v598 = vunpack.c.l.b16 %v558
    %v599 = vunpack.c.l.b16 %v559
    %v600 = vunpack.c.l.b16 %v560
    %v601 = vunpack.c.l.b16 %v561
    %v602 = vunpack.c.l.b16 %v562
    %v603 = vunpack.c.l.b16 %v563
    %v604 = vunpack.c.l.b16 %v564
    %v605 = vunpack.c.l.b16 %v565
    %v606 = vunpack.c.l.b16 %v566
    %v607 = vunpack.c.l.b16 %v567
    %v608 = vunpack.c.l.b16 %v568
    %v609 = vunpack.c.l.b16 %v569
    %v610 = vunpack.c.l.b16 %v570
    %v611 = vunpack.c.l.b16 %v571
    %v612 = vpack.c.b16 %v597, %v596
    %v613 = vpack.c.b16 %v599, %v598
    %v614 = vpack.c.b16 %v601, %v600
    %v615 = vpack.c.b16 %v603, %v602
    %v616 = vpack.c.b16 %v605, %v604
    %v617 = vpack.c.b16 %v607, %v606
    %v618 = vpack.c.b16 %v609, %v608
    %v619 = vpack.c.b16 %v611, %v610
    %628 = vmatprep.subr.bf16.mxu0 0
    %629 = vmatpush1.bf16.msra.mxu0 %v619
    %630 = vmatprep.subr.bf16.mxu0 0
    %631 = vmatpush1.bf16.msra.mxu0 %v618
    %632 = vmatprep.subr.bf16.mxu0 0
    %633 = vmatpush1.bf16.msra.mxu0 %v617
    %634 = vmatprep.subr.bf16.mxu0 0
    %635 = vmatpush1.bf16.msra.mxu0 %v616
    %636 = vmatprep.subr.bf16.mxu0 0
    %637 = vmatpush1.bf16.msra.mxu0 %v615
    %638 = vmatprep.subr.bf16.mxu0 0
    %639 = vmatpush1.bf16.msra.mxu0 %v614
    %640 = vmatprep.subr.bf16.mxu0 0
    %641 = vmatpush1.bf16.msra.mxu0 %v613
    %642 = vmatprep.subr.bf16.mxu0 0
    %643 = vmatpush1.bf16.msra.mxu0 %v612
    %644 = vmatprep.subr.bf16.mxu0 0
    %645 = vmatpush2.bf16.msra.mxu0 0
    %646 = vmatprep.subr.bf16.mxu0 0
    %647 = vmatpush2.bf16.msra.mxu0 0
    %648 = vmatprep.subr.bf16.mxu0 0
    %649 = vmatpush2.bf16.msra.mxu0 0
    %650 = vmatprep.subr.bf16.mxu0 0
    %651 = vmatpush2.bf16.msra.mxu0 0
    %652 = vmatprep.subr.bf16.mxu0 0
    %653 = vmatpush2.bf16.msra.mxu0 0
    %654 = vmatprep.subr.bf16.mxu0 0
    %655 = vmatpush2.bf16.msra.mxu0 0
    %656 = vmatprep.subr.bf16.mxu0 0
    %657 = vmatpush2.bf16.msra.mxu0 0
    %658 = vmatprep.subr.bf16.mxu0 0
    %659 = vmatpush2.bf16.msra.mxu0 0
    %660 = vmatprep.mubr.bf16.mxu0 0
    %661 = vmatmul.mubr.bf16.gmra.mxu0 %v553
    %v662 = vpop.f32.mrf.mxu0
    %v663 = vadd.f32 %v578, %v662
    %v664 = vpop.f32.mrf.mxu0
    %v665 = vpop.f32.mrf.mxu0
    %v666 = vadd.f32 %v578, %v665
    %v667 = vpop.f32.mrf.mxu0
    %668 = vmatprep.mubr.bf16.mxu0 0
    %669 = vmatmul.mubr.bf16.gmra.mxu0 %v554
    %v670 = vpop.f32.mrf.mxu0
    %v671 = vadd.f32 %v578, %v670
    %v672 = vpop.f32.mrf.mxu0
    %v673 = vpop.f32.mrf.mxu0
    %v674 = vadd.f32 %v578, %v673
    %v675 = vpop.f32.mrf.mxu0
    %676 = vdwg.mxu0
    %v677 = vmax.f32 %v663, 0.0
    %v678 = vmax.f32 %v666, 0.0
    %v679 = vmax.f32 %v671, 0.0
    %v680 = vmax.f32 %v674, 0.0
    %v681 = vpack.c.bf16 %v678, %v677
    %v682 = vpack.c.bf16 %v680, %v679
    %683 = vmatprep.subr.bf16.mxu0 0
    %684 = vmatpush1.bf16.msra.mxu0 0
    %685 = vmatprep.subr.bf16.mxu0 0
    %686 = vmatpush1.bf16.msra.mxu0 0
    %687 = vmatprep.subr.bf16.mxu0 0
    %688 = vmatpush1.bf16.msra.mxu0 0
    %689 = vmatprep.subr.bf16.mxu0 0
    %690 = vmatpush1.bf16.msra.mxu0 0
    %691 = vmatprep.subr.bf16.mxu0 0
    %692 = vmatpush1.bf16.msra.mxu0 0
    %693 = vmatprep.subr.bf16.mxu0 0
    %694 = vmatpush1.bf16.msra.mxu0 0
    %695 = vmatprep.subr.bf16.mxu0 0
    %696 = vmatpush1.bf16.msra.mxu0 %v682
    %697 = vmatprep.subr.bf16.mxu0 0
    %698 = vmatpush1.bf16.msra.mxu0 %v681
    %699 = vmatprep.subr.bf16.mxu0 0
    %700 = vmatpush2.bf16.msra.mxu0 0
    %701 = vmatprep.subr.bf16.mxu0 0
    %702 = vmatpush2.bf16.msra.mxu0 0
    %703 = vmatprep.subr.bf16.mxu0 0
    %704 = vmatpush2.bf16.msra.mxu0 0
    %705 = vmatprep.subr.bf16.mxu0 0
    %706 = vmatpush2.bf16.msra.mxu0 0
    %707 = vmatprep.subr.bf16.mxu0 0
    %708 = vmatpush2.bf16.msra.mxu0 0
    %709 = vmatprep.subr.bf16.mxu0 0
    %710 = vmatpush2.bf16.msra.mxu0 0
    %711 = vmatprep.subr.bf16.mxu0 0
    %712 = vmatpush2.bf16.msra.mxu0 0
    %713 = vmatprep.subr.bf16.mxu0 0
    %714 = vmatpush2.bf16.msra.mxu0 0
    %715 = vmatprep.mubr.bf16.mxu0 0
    %716 = vmatmul.mubr.bf16.gmra.mxu0 %v66
    %v717 = vpop.f32.mrf.mxu0
    %v718 = vadd.f32 0.0, %v717
    %v719 = vpop.f32.mrf.mxu0
    %v720 = vpop.f32.mrf.mxu0
    %v721 = vadd.f32 0.0, %v720
    %v722 = vpop.f32.mrf.mxu0
    %723 = vmatprep.mubr.bf16.mxu0 0
    %724 = vmatmul.mubr.bf16.gmra.mxu0 %v69
    %v725 = vpop.f32.mrf.mxu0
    %v726 = vadd.f32 0.0, %v725
    %v727 = vpop.f32.mrf.mxu0
    %v728 = vpop.f32.mrf.mxu0
    %v729 = vadd.f32 0.0, %v728
    %v730 = vpop.f32.mrf.mxu0
    %731 = vdwg.mxu0
    %v732 = vpack.c.bf16 %v721, %v718
    %v733 = vpack.c.bf16 %v729, %v726
    %s734 = scalar_lea.vmem [#allocation2], 256
    %v735 = vld [vmem:[%s734] sm:$0xf]
    %v736 = vld [vmem:[%s734 + $0x4] sm:$0xf]
    %v737 = vld [vmem:[%s734 + $0x8] sm:$0xf]
    %v738 = vld [vmem:[%s734 + $0xc] sm:$0xf]
    %v739 = vld [vmem:[%s734 + $0x10] sm:$0xf]
    %v740 = vld [vmem:[%s734 + $0x14] sm:$0xf]
    %v741 = vld [vmem:[%s734 + $0x18] sm:$0xf]
    %v742 = vld [vmem:[%s734 + $0x1c] sm:$0xf]
    %v743 = vld [vmem:[%s734 + $0x20] sm:$0xf]
    %v744 = vld [vmem:[%s734 + $0x24] sm:$0xf]
    %v745 = vld [vmem:[%s734 + $0x28] sm:$0xf]
    %v746 = vld [vmem:[%s734 + $0x2c] sm:$0xf]
    %v747 = vld [vmem:[%s734 + $0x30] sm:$0xf]
    %v748 = vld [vmem:[%s734 + $0x34] sm:$0xf]
    %v749 = vld [vmem:[%s734 + $0x38] sm:$0xf]
    %v750 = vld [vmem:[%s734 + $0x3c] sm:$0xf]
    %s751 = scalar_lea.vmem %s3, 4
    %v752 = vld [vmem:[%s751] sm:$0x1]
    %v754 = vlaneseq
    %v755 = vshrl.u32 %v754, 7
    %v756 = vsub.s32 0, %v755
    %v757 = vrot.slane %v752, %v756
    %v775 = vunpack.c.l.b16 %v735
    %v776 = vunpack.c.l.b16 %v736
    %v777 = vunpack.c.l.b16 %v737
    %v778 = vunpack.c.l.b16 %v738
    %v779 = vunpack.c.l.b16 %v739
    %v780 = vunpack.c.l.b16 %v740
    %v781 = vunpack.c.l.b16 %v741
    %v782 = vunpack.c.l.b16 %v742
    %v783 = vunpack.c.l.b16 %v743
    %v784 = vunpack.c.l.b16 %v744
    %v785 = vunpack.c.l.b16 %v745
    %v786 = vunpack.c.l.b16 %v746
    %v787 = vunpack.c.l.b16 %v747
    %v788 = vunpack.c.l.b16 %v748
    %v789 = vunpack.c.l.b16 %v749
    %v790 = vunpack.c.l.b16 %v750
    %v791 = vpack.c.b16 %v776, %v775
    %v792 = vpack.c.b16 %v778, %v777
    %v793 = vpack.c.b16 %v780, %v779
    %v794 = vpack.c.b16 %v782, %v781
    %v795 = vpack.c.b16 %v784, %v783
    %v796 = vpack.c.b16 %v786, %v785
    %v797 = vpack.c.b16 %v788, %v787
    %v798 = vpack.c.b16 %v790, %v789
    %807 = vmatprep.subr.bf16.mxu0 0
    %808 = vmatpush1.bf16.msra.mxu0 %v798
    %809 = vmatprep.subr.bf16.mxu0 0
    %810 = vmatpush1.bf16.msra.mxu0 %v797
    %811 = vmatprep.subr.bf16.mxu0 0
    %812 = vmatpush1.bf16.msra.mxu0 %v796
    %813 = vmatprep.subr.bf16.mxu0 0
    %814 = vmatpush1.bf16.msra.mxu0 %v795
    %815 = vmatprep.subr.bf16.mxu0 0
    %816 = vmatpush1.bf16.msra.mxu0 %v794
    %817 = vmatprep.subr.bf16.mxu0 0
    %818 = vmatpush1.bf16.msra.mxu0 %v793
    %819 = vmatprep.subr.bf16.mxu0 0
    %820 = vmatpush1.bf16.msra.mxu0 %v792
    %821 = vmatprep.subr.bf16.mxu0 0
    %822 = vmatpush1.bf16.msra.mxu0 %v791
    %823 = vmatprep.subr.bf16.mxu0 0
    %824 = vmatpush2.bf16.msra.mxu0 0
    %825 = vmatprep.subr.bf16.mxu0 0
    %826 = vmatpush2.bf16.msra.mxu0 0
    %827 = vmatprep.subr.bf16.mxu0 0
    %828 = vmatpush2.bf16.msra.mxu0 0
    %829 = vmatprep.subr.bf16.mxu0 0
    %830 = vmatpush2.bf16.msra.mxu0 0
    %831 = vmatprep.subr.bf16.mxu0 0
    %832 = vmatpush2.bf16.msra.mxu0 0
    %833 = vmatprep.subr.bf16.mxu0 0
    %834 = vmatpush2.bf16.msra.mxu0 0
    %835 = vmatprep.subr.bf16.mxu0 0
    %836 = vmatpush2.bf16.msra.mxu0 0
    %837 = vmatprep.subr.bf16.mxu0 0
    %838 = vmatpush2.bf16.msra.mxu0 0
    %839 = vmatprep.mubr.bf16.mxu0 0
    %840 = vmatmul.mubr.bf16.gmra.mxu0 %v732
    %v841 = vpop.f32.mrf.mxu0
    %v842 = vadd.f32 %v757, %v841
    %v843 = vpop.f32.mrf.mxu0
    %v844 = vpop.f32.mrf.mxu0
    %v845 = vadd.f32 %v757, %v844
    %v846 = vpop.f32.mrf.mxu0
    %847 = vmatprep.mubr.bf16.mxu0 0
    %848 = vmatmul.mubr.bf16.gmra.mxu0 %v733
    %v849 = vpop.f32.mrf.mxu0
    %v850 = vadd.f32 %v757, %v849
    %v851 = vpop.f32.mrf.mxu0
    %v852 = vpop.f32.mrf.mxu0
    %v853 = vadd.f32 %v757, %v852
    %v854 = vpop.f32.mrf.mxu0
    %855 = vdwg.mxu0
    %v856 = vmax.f32 %v842, 0.0
    %v857 = vmax.f32 %v845, 0.0
    %v858 = vmax.f32 %v850, 0.0
    %v859 = vmax.f32 %v853, 0.0
    %v860 = vpack.c.bf16 %v857, %v856
    %v861 = vpack.c.bf16 %v859, %v858
    %s862 = scalar_lea.vmem [#allocation2], 320
    %v863 = vld [vmem:[%s862] sm:$0xf]
    %v864 = vld [vmem:[%s862 + $0x4] sm:$0xf]
    %v865 = vld [vmem:[%s862 + $0x8] sm:$0xf]
    %v866 = vld [vmem:[%s862 + $0xc] sm:$0xf]
    %v867 = vld [vmem:[%s862 + $0x10] sm:$0xf]
    %v868 = vld [vmem:[%s862 + $0x14] sm:$0xf]
    %v869 = vld [vmem:[%s862 + $0x18] sm:$0xf]
    %v870 = vld [vmem:[%s862 + $0x1c] sm:$0xf]
    %v871 = vld [vmem:[%s862 + $0x20] sm:$0xf]
    %v872 = vld [vmem:[%s862 + $0x24] sm:$0xf]
    %v873 = vld [vmem:[%s862 + $0x28] sm:$0xf]
    %v874 = vld [vmem:[%s862 + $0x2c] sm:$0xf]
    %v875 = vld [vmem:[%s862 + $0x30] sm:$0xf]
    %v876 = vld [vmem:[%s862 + $0x34] sm:$0xf]
    %v877 = vld [vmem:[%s862 + $0x38] sm:$0xf]
    %v878 = vld [vmem:[%s862 + $0x3c] sm:$0xf]
    %s879 = scalar_lea.vmem %s3, 5
    %v880 = vld [vmem:[%s879] sm:$0x1]
    %v882 = vlaneseq
    %v883 = vshrl.u32 %v882, 7
    %v884 = vsub.s32 0, %v883
    %v885 = vrot.slane %v880, %v884
    %v903 = vunpack.c.l.b16 %v863
    %v904 = vunpack.c.l.b16 %v864
    %v905 = vunpack.c.l.b16 %v865
    %v906 = vunpack.c.l.b16 %v866
    %v907 = vunpack.c.l.b16 %v867
    %v908 = vunpack.c.l.b16 %v868
    %v909 = vunpack.c.l.b16 %v869
    %v910 = vunpack.c.l.b16 %v870
    %v911 = vunpack.c.l.b16 %v871
    %v912 = vunpack.c.l.b16 %v872
    %v913 = vunpack.c.l.b16 %v873
    %v914 = vunpack.c.l.b16 %v874
    %v915 = vunpack.c.l.b16 %v875
    %v916 = vunpack.c.l.b16 %v876
    %v917 = vunpack.c.l.b16 %v877
    %v918 = vunpack.c.l.b16 %v878
    %v919 = vpack.c.b16 %v904, %v903
    %v920 = vpack.c.b16 %v906, %v905
    %v921 = vpack.c.b16 %v908, %v907
    %v922 = vpack.c.b16 %v910, %v909
    %v923 = vpack.c.b16 %v912, %v911
    %v924 = vpack.c.b16 %v914, %v913
    %v925 = vpack.c.b16 %v916, %v915
    %v926 = vpack.c.b16 %v918, %v917
    %935 = vmatprep.subr.bf16.mxu0 0
    %936 = vmatpush1.bf16.msra.mxu0 %v926
    %937 = vmatprep.subr.bf16.mxu0 0
    %938 = vmatpush1.bf16.msra.mxu0 %v925
    %939 = vmatprep.subr.bf16.mxu0 0
    %940 = vmatpush1.bf16.msra.mxu0 %v924
    %941 = vmatprep.subr.bf16.mxu0 0
    %942 = vmatpush1.bf16.msra.mxu0 %v923
    %943 = vmatprep.subr.bf16.mxu0 0
    %944 = vmatpush1.bf16.msra.mxu0 %v922
    %945 = vmatprep.subr.bf16.mxu0 0
    %946 = vmatpush1.bf16.msra.mxu0 %v921
    %947 = vmatprep.subr.bf16.mxu0 0
    %948 = vmatpush1.bf16.msra.mxu0 %v920
    %949 = vmatprep.subr.bf16.mxu0 0
    %950 = vmatpush1.bf16.msra.mxu0 %v919
    %951 = vmatprep.subr.bf16.mxu0 0
    %952 = vmatpush2.bf16.msra.mxu0 0
    %953 = vmatprep.subr.bf16.mxu0 0
    %954 = vmatpush2.bf16.msra.mxu0 0
    %955 = vmatprep.subr.bf16.mxu0 0
    %956 = vmatpush2.bf16.msra.mxu0 0
    %957 = vmatprep.subr.bf16.mxu0 0
    %958 = vmatpush2.bf16.msra.mxu0 0
    %959 = vmatprep.subr.bf16.mxu0 0
    %960 = vmatpush2.bf16.msra.mxu0 0
    %961 = vmatprep.subr.bf16.mxu0 0
    %962 = vmatpush2.bf16.msra.mxu0 0
    %963 = vmatprep.subr.bf16.mxu0 0
    %964 = vmatpush2.bf16.msra.mxu0 0
    %965 = vmatprep.subr.bf16.mxu0 0
    %966 = vmatpush2.bf16.msra.mxu0 0
    %967 = vmatprep.mubr.bf16.mxu0 0
    %968 = vmatmul.mubr.bf16.gmra.mxu0 %v860
    %v969 = vpop.f32.mrf.mxu0
    %v970 = vadd.f32 %v885, %v969
    %v971 = vpop.f32.mrf.mxu0
    %v972 = vpop.f32.mrf.mxu0
    %v973 = vadd.f32 %v885, %v972
    %v974 = vpop.f32.mrf.mxu0
    %975 = vmatprep.mubr.bf16.mxu0 0
    %976 = vmatmul.mubr.bf16.gmra.mxu0 %v861
    %v977 = vpop.f32.mrf.mxu0
    %v978 = vadd.f32 %v885, %v977
    %v979 = vpop.f32.mrf.mxu0
    %v980 = vpop.f32.mrf.mxu0
    %v981 = vadd.f32 %v885, %v980
    %v982 = vpop.f32.mrf.mxu0
    %983 = vdwg.mxu0
    %v984 = vmax.f32 %v970, 0.0
    %v985 = vmax.f32 %v973, 0.0
    %v986 = vmax.f32 %v978, 0.0
    %v987 = vmax.f32 %v981, 0.0
    %v988 = vpack.c.bf16 %v985, %v984
    %v989 = vpack.c.bf16 %v987, %v986
    %v991 = vsel %vm64, %v37, 0
    %993 = vmatprep.subr.bf16.mxu0 0
    %994 = vmatpush1.bf16.msra.mxu0 0
    %995 = vmatprep.subr.bf16.mxu0 0
    %996 = vmatpush1.bf16.msra.mxu0 0
    %997 = vmatprep.subr.bf16.mxu0 0
    %998 = vmatpush1.bf16.msra.mxu0 0
    %999 = vmatprep.subr.bf16.mxu0 0
    %1000 = vmatpush1.bf16.msra.mxu0 0
    %1001 = vmatprep.subr.bf16.mxu0 0
    %1002 = vmatpush1.bf16.msra.mxu0 0
    %1003 = vmatprep.subr.bf16.mxu0 0
    %1004 = vmatpush1.bf16.msra.mxu0 0
    %1005 = vmatprep.subr.bf16.mxu0 0
    %1006 = vmatpush1.bf16.msra.mxu0 %v989
    %1007 = vmatprep.subr.bf16.mxu0 0
    %1008 = vmatpush1.bf16.msra.mxu0 %v988
    %1009 = vmatprep.subr.bf16.mxu0 0
    %1010 = vmatpush2.bf16.msra.mxu0 0
    %1011 = vmatprep.subr.bf16.mxu0 0
    %1012 = vmatpush2.bf16.msra.mxu0 0
    %1013 = vmatprep.subr.bf16.mxu0 0
    %1014 = vmatpush2.bf16.msra.mxu0 0
    %1015 = vmatprep.subr.bf16.mxu0 0
    %1016 = vmatpush2.bf16.msra.mxu0 0
    %1017 = vmatprep.subr.bf16.mxu0 0
    %1018 = vmatpush2.bf16.msra.mxu0 0
    %1019 = vmatprep.subr.bf16.mxu0 0
    %1020 = vmatpush2.bf16.msra.mxu0 0
    %1021 = vmatprep.subr.bf16.mxu0 0
    %1022 = vmatpush2.bf16.msra.mxu0 0
    %1023 = vmatprep.subr.bf16.mxu0 0
    %1024 = vmatpush2.bf16.msra.mxu0 0
    %1025 = vmatprep.mubr.bf16.mxu0 0
    %1026 = vmatmul.mubr.bf16.gmra.mxu0 %v991
    %v1027 = vpop.f32.mrf.mxu0
    %v1028 = vadd.f32 0.0, %v1027
    %v1029 = vpop.f32.mrf.mxu0
    %v1030 = vpop.f32.mrf.mxu0
    %v1031 = vpop.f32.mrf.mxu0
    %1032 = vdwg.mxu0
    %v1033 = vpack.c.bf16 %v1028, %v1028
    %s1034 = scalar_lea.vmem [#allocation2], 384
    %v1035 = vld [vmem:[%s1034] sm:$0xf]
    %v1036 = vld [vmem:[%s1034 + $0x4] sm:$0xf]
    %v1037 = vld [vmem:[%s1034 + $0x8] sm:$0xf]
    %v1038 = vld [vmem:[%s1034 + $0xc] sm:$0xf]
    %v1039 = vld [vmem:[%s1034 + $0x10] sm:$0xf]
    %v1040 = vld [vmem:[%s1034 + $0x14] sm:$0xf]
    %v1041 = vld [vmem:[%s1034 + $0x18] sm:$0xf]
    %v1042 = vld [vmem:[%s1034 + $0x1c] sm:$0xf]
    %v1043 = vld [vmem:[%s1034 + $0x20] sm:$0xf]
    %v1044 = vld [vmem:[%s1034 + $0x24] sm:$0xf]
    %v1045 = vld [vmem:[%s1034 + $0x28] sm:$0xf]
    %v1046 = vld [vmem:[%s1034 + $0x2c] sm:$0xf]
    %v1047 = vld [vmem:[%s1034 + $0x30] sm:$0xf]
    %v1048 = vld [vmem:[%s1034 + $0x34] sm:$0xf]
    %v1049 = vld [vmem:[%s1034 + $0x38] sm:$0xf]
    %v1050 = vld [vmem:[%s1034 + $0x3c] sm:$0xf]
    %s1051 = scalar_lea.vmem %s3, 6
    %v1052 = vld [vmem:[%s1051] sm:$0x1]
    %v1054 = vlaneseq
    %v1055 = vshrl.u32 %v1054, 7
    %v1056 = vsub.s32 0, %v1055
    %v1057 = vrot.slane %v1052, %v1056
    %v1075 = vunpack.c.l.b16 %v1035
    %v1076 = vunpack.c.l.b16 %v1036
    %v1077 = vunpack.c.l.b16 %v1037
    %v1078 = vunpack.c.l.b16 %v1038
    %v1079 = vunpack.c.l.b16 %v1039
    %v1080 = vunpack.c.l.b16 %v1040
    %v1081 = vunpack.c.l.b16 %v1041
    %v1082 = vunpack.c.l.b16 %v1042
    %v1083 = vunpack.c.l.b16 %v1043
    %v1084 = vunpack.c.l.b16 %v1044
    %v1085 = vunpack.c.l.b16 %v1045
    %v1086 = vunpack.c.l.b16 %v1046
    %v1087 = vunpack.c.l.b16 %v1047
    %v1088 = vunpack.c.l.b16 %v1048
    %v1089 = vunpack.c.l.b16 %v1049
    %v1090 = vunpack.c.l.b16 %v1050
    %v1091 = vpack.c.b16 %v1076, %v1075
    %v1092 = vpack.c.b16 %v1078, %v1077
    %v1093 = vpack.c.b16 %v1080, %v1079
    %v1094 = vpack.c.b16 %v1082, %v1081
    %v1095 = vpack.c.b16 %v1084, %v1083
    %v1096 = vpack.c.b16 %v1086, %v1085
    %v1097 = vpack.c.b16 %v1088, %v1087
    %v1098 = vpack.c.b16 %v1090, %v1089
    %1107 = vmatprep.subr.bf16.mxu0 0
    %1108 = vmatpush1.bf16.msra.mxu0 %v1098
    %1109 = vmatprep.subr.bf16.mxu0 0
    %1110 = vmatpush1.bf16.msra.mxu0 %v1097
    %1111 = vmatprep.subr.bf16.mxu0 0
    %1112 = vmatpush1.bf16.msra.mxu0 %v1096
    %1113 = vmatprep.subr.bf16.mxu0 0
    %1114 = vmatpush1.bf16.msra.mxu0 %v1095
    %1115 = vmatprep.subr.bf16.mxu0 0
    %1116 = vmatpush1.bf16.msra.mxu0 %v1094
    %1117 = vmatprep.subr.bf16.mxu0 0
    %1118 = vmatpush1.bf16.msra.mxu0 %v1093
    %1119 = vmatprep.subr.bf16.mxu0 0
    %1120 = vmatpush1.bf16.msra.mxu0 %v1092
    %1121 = vmatprep.subr.bf16.mxu0 0
    %1122 = vmatpush1.bf16.msra.mxu0 %v1091
    %1123 = vmatprep.subr.bf16.mxu0 0
    %1124 = vmatpush2.bf16.msra.mxu0 0
    %1125 = vmatprep.subr.bf16.mxu0 0
    %1126 = vmatpush2.bf16.msra.mxu0 0
    %1127 = vmatprep.subr.bf16.mxu0 0
    %1128 = vmatpush2.bf16.msra.mxu0 0
    %1129 = vmatprep.subr.bf16.mxu0 0
    %1130 = vmatpush2.bf16.msra.mxu0 0
    %1131 = vmatprep.subr.bf16.mxu0 0
    %1132 = vmatpush2.bf16.msra.mxu0 0
    %1133 = vmatprep.subr.bf16.mxu0 0
    %1134 = vmatpush2.bf16.msra.mxu0 0
    %1135 = vmatprep.subr.bf16.mxu0 0
    %1136 = vmatpush2.bf16.msra.mxu0 0
    %1137 = vmatprep.subr.bf16.mxu0 0
    %1138 = vmatpush2.bf16.msra.mxu0 0
    %1139 = vmatprep.mubr.bf16.mxu0 0
    %1140 = vmatmul.mubr.bf16.gmra.mxu0 %v1033
    %v1141 = vpop.f32.mrf.mxu0
    %v1142 = vadd.f32 %v1057, %v1141
    %v1143 = vpop.f32.mrf.mxu0
    %v1144 = vpop.f32.mrf.mxu0
    %v1145 = vpop.f32.mrf.mxu0
    %1146 = vdwg.mxu0
    %v1147 = vmax.f32 %v1142, 0.0
    %v1148 = vpack.c.bf16 %v1147, %v1147
    %s1149 = scalar_lea.vmem [#allocation2], 448
    %v1150 = vld [vmem:[%s1149] sm:$0xf]
    %v1151 = vld [vmem:[%s1149 + $0x4] sm:$0xf]
    %v1152 = vld [vmem:[%s1149 + $0x8] sm:$0xf]
    %v1153 = vld [vmem:[%s1149 + $0xc] sm:$0xf]
    %v1154 = vld [vmem:[%s1149 + $0x10] sm:$0xf]
    %v1155 = vld [vmem:[%s1149 + $0x14] sm:$0xf]
    %v1156 = vld [vmem:[%s1149 + $0x18] sm:$0xf]
    %v1157 = vld [vmem:[%s1149 + $0x1c] sm:$0xf]
    %v1158 = vld [vmem:[%s1149 + $0x20] sm:$0xf]
    %v1159 = vld [vmem:[%s1149 + $0x24] sm:$0xf]
    %v1160 = vld [vmem:[%s1149 + $0x28] sm:$0xf]
    %v1161 = vld [vmem:[%s1149 + $0x2c] sm:$0xf]
    %v1162 = vld [vmem:[%s1149 + $0x30] sm:$0xf]
    %v1163 = vld [vmem:[%s1149 + $0x34] sm:$0xf]
    %v1164 = vld [vmem:[%s1149 + $0x38] sm:$0xf]
    %v1165 = vld [vmem:[%s1149 + $0x3c] sm:$0xf]
    %s1166 = scalar_lea.vmem %s3, 7
    %v1167 = vld [vmem:[%s1166] sm:$0x1]
    %v1169 = vlaneseq
    %v1170 = vshrl.u32 %v1169, 7
    %v1171 = vsub.s32 0, %v1170
    %v1172 = vrot.slane %v1167, %v1171
    %v1190 = vunpack.c.l.b16 %v1150
    %v1191 = vunpack.c.l.b16 %v1151
    %v1192 = vunpack.c.l.b16 %v1152
    %v1193 = vunpack.c.l.b16 %v1153
    %v1194 = vunpack.c.l.b16 %v1154
    %v1195 = vunpack.c.l.b16 %v1155
    %v1196 = vunpack.c.l.b16 %v1156
    %v1197 = vunpack.c.l.b16 %v1157
    %v1198 = vunpack.c.l.b16 %v1158
    %v1199 = vunpack.c.l.b16 %v1159
    %v1200 = vunpack.c.l.b16 %v1160
    %v1201 = vunpack.c.l.b16 %v1161
    %v1202 = vunpack.c.l.b16 %v1162
    %v1203 = vunpack.c.l.b16 %v1163
    %v1204 = vunpack.c.l.b16 %v1164
    %v1205 = vunpack.c.l.b16 %v1165
    %v1206 = vpack.c.b16 %v1191, %v1190
    %v1207 = vpack.c.b16 %v1193, %v1192
    %v1208 = vpack.c.b16 %v1195, %v1194
    %v1209 = vpack.c.b16 %v1197, %v1196
    %v1210 = vpack.c.b16 %v1199, %v1198
    %v1211 = vpack.c.b16 %v1201, %v1200
    %v1212 = vpack.c.b16 %v1203, %v1202
    %v1213 = vpack.c.b16 %v1205, %v1204
    %1222 = vmatprep.subr.bf16.mxu0 0
    %1223 = vmatpush1.bf16.msra.mxu0 %v1213
    %1224 = vmatprep.subr.bf16.mxu0 0
    %1225 = vmatpush1.bf16.msra.mxu0 %v1212
    %1226 = vmatprep.subr.bf16.mxu0 0
    %1227 = vmatpush1.bf16.msra.mxu0 %v1211
    %1228 = vmatprep.subr.bf16.mxu0 0
    %1229 = vmatpush1.bf16.msra.mxu0 %v1210
    %1230 = vmatprep.subr.bf16.mxu0 0
    %1231 = vmatpush1.bf16.msra.mxu0 %v1209
    %1232 = vmatprep.subr.bf16.mxu0 0
    %1233 = vmatpush1.bf16.msra.mxu0 %v1208
    %1234 = vmatprep.subr.bf16.mxu0 0
    %1235 = vmatpush1.bf16.msra.mxu0 %v1207
    %1236 = vmatprep.subr.bf16.mxu0 0
    %1237 = vmatpush1.bf16.msra.mxu0 %v1206
    %1238 = vmatprep.subr.bf16.mxu0 0
    %1239 = vmatpush2.bf16.msra.mxu0 0
    %1240 = vmatprep.subr.bf16.mxu0 0
    %1241 = vmatpush2.bf16.msra.mxu0 0
    %1242 = vmatprep.subr.bf16.mxu0 0
    %1243 = vmatpush2.bf16.msra.mxu0 0
    %1244 = vmatprep.subr.bf16.mxu0 0
    %1245 = vmatpush2.bf16.msra.mxu0 0
    %1246 = vmatprep.subr.bf16.mxu0 0
    %1247 = vmatpush2.bf16.msra.mxu0 0
    %1248 = vmatprep.subr.bf16.mxu0 0
    %1249 = vmatpush2.bf16.msra.mxu0 0
    %1250 = vmatprep.subr.bf16.mxu0 0
    %1251 = vmatpush2.bf16.msra.mxu0 0
    %1252 = vmatprep.subr.bf16.mxu0 0
    %1253 = vmatpush2.bf16.msra.mxu0 0
    %1254 = vmatprep.mubr.bf16.mxu0 0
    %1255 = vmatmul.mubr.bf16.gmra.mxu0 %v1148
    %v1256 = vpop.f32.mrf.mxu0
    %v1257 = vadd.f32 %v1172, %v1256
    %v1258 = vpop.f32.mrf.mxu0
    %v1259 = vpop.f32.mrf.mxu0
    %v1260 = vpop.f32.mrf.mxu0
    %1261 = vdwg.mxu0
    %1262 = vst [vmem:[#allocation5] sm:$0xff] %v1257
    // Predicated region
    $region22: #{tpu_custom_call.1} parent=1 // pred_check
      _
    $region23: #{tpu_custom_call.1} parent=1 // pred_check_branch
      %1264 = sbr.rel (0) target = $region25
    $region24: #{tpu_custom_call.1} parent=1 // pred_region
      %s1266 = ssub.s32 128, 128
      %1267 = vsyncadd [#allocation4], %s1266
      %s1269 = sshll.u32 [#allocation5], 4
      %s1270 = int_to_ptr.vmem [resolvable:$true] %s1269
      %1272 = dma.vmem_to_hbm [thread:$0]  %s1270, 128, %s4, [#allocation4]
    $region25: #{tpu_custom_call.1} parent=1 // pred_fallthru
      _
    // Predicated region
    $region26: #{tpu_custom_call.1} parent=1 // pred_check
      _
    $region27: #{tpu_custom_call.1} parent=1 // pred_check_branch
      %1274 = sbr.rel (0) target = $region29
    $region28: #{tpu_custom_call.1} parent=1 // pred_region
      %1275 = dma.done [#allocation4], 128
    $region29: #{tpu_custom_call.1} parent=1 // pred_fallthru
      _
    %1276 = vsyncpa [#allocation3], 1
    %1277 = vsyncpa [#allocation4], 1

</llo_original>
